<compile_context>
chip_gen: v6e
topology: v6e:2x2x1
jax: 0.10.0
libtpu: 0.0.40
codegen_flags: <defaults>
</compile_context>

<pallas_src>
import functools

import numpy as np
import jax
import jax.numpy as jnp
from jax import lax
from jax.experimental import pallas as pl
from jax.experimental.pallas import tpu as pltpu

NORM_EPS = 1e-12     # F.normalize eps
NEG_INF = -1e30      # finite "minus infinity": masked rows give finite*0 = 0, not nan


# ----------------------------- Pallas kernel ---------------------------------
def _clip_loss_kernel(ids_ref, film_ref, text_ref, loss_ref, *, scale):
    # ids_ref : (TB, 1, N) int32   (middle singleton keeps the block (8,128)-legal)
    # film/text_ref : (TB, N, D)   native dtype, upcast after the VMEM load
    # loss_ref: (TB, 1, 1) f32     per-example loss
    ids = ids_ref[...]                                     # (TB, 1, N)
    film = film_ref[...].astype(jnp.float32)               # (TB, N, D)
    text = text_ref[...].astype(jnp.float32)               # (TB, N, D)

    mask = (ids[:, 0, :] != 0).astype(jnp.float32)         # (TB, N) 1.0 = valid slot

    # F.normalize: x / max(||x||_2, eps) == x * rsqrt(max(sum(x^2), eps^2))
    def inv_l2(x):
        ss = jnp.sum(x * x, axis=-1, keepdims=True)
        return lax.rsqrt(jnp.maximum(ss, NORM_EPS * NORM_EPS))

    # Fold exp(temperature) into one operand: no per-element multiply on sim.
    film_n = film * (inv_l2(film) * scale)                 # (TB, N, D)
    text_n = text * inv_l2(text)                           # (TB, N, D)

    # sim[b, i, j] = scale * <film_i, text_j>  -- single MXU einsum; the
    # text->image direction is its transpose and is never materialized.
    sim = jnp.einsum('bnd,bmd->bnm', film_n, text_n,
                     preferred_element_type=jnp.float32)   # (TB, N, N)

    # diagonal sim[b, i, i] without an (N,N) eye mask
    diag = jnp.sum(film_n * text_n, axis=-1)               # (TB, N)

    bias = (1.0 - mask) * NEG_INF                          # (TB, N): 0 valid, -1e30 pad
    n_valid = jnp.maximum(jnp.sum(mask, axis=-1, keepdims=True), 1.0)   # (TB, 1)

    def lse(s, axis):
        m = jnp.max(s, axis=axis, keepdims=True)
        return jnp.log(jnp.sum(jnp.exp(s - m), axis=axis, keepdims=True)) + m

    # image->text: mask padded text columns, reduce over lanes (axis -1)
    lse_i2t = lse(sim + bias[:, None, :], axis=-1)[:, :, 0]     # (TB, N)
    # text->image: mask padded film rows, reduce over sublanes (axis -2)
    lse_t2i = lse(sim + bias[:, :, None], axis=-2)[:, 0, :]     # (TB, N)

    per_row = (0.5 * (lse_i2t + lse_t2i) - diag) * mask          # padded rows -> 0
    per_ex = jnp.sum(per_row, axis=-1, keepdims=True) / n_valid  # (TB, 1)
    loss_ref[...] = per_ex[:, :, None]                           # (TB, 1, 1)


# ------------------------------- wrapper --------------------------------------
def _pick_batch_tile(B, N, D, emb_itemsize, budget_bytes=6 << 20):
    """Largest divisor of B whose per-grid-step VMEM footprint fits the budget."""
    per_ex = (2 * (N * 4 + 2 * N * D * emb_itemsize)   # double-buffered input blocks
              + 2 * N * D * 4                          # f32 upcast copies
              + N * N * 4                              # sim matrix
              + 4 * N * 4)                             # mask / bias / lse rows
    tb = int(max(1, min(B, budget_bytes // max(per_ex, 1))))
    while B % tb:
        tb -= 1
    return tb


@functools.partial(jax.jit, static_argnames=("temperature", "batch_tile"))
def clip_loss(film_ids, films_embeddings, text_embeddings, temperature=0.07,
              batch_tile=None):
    """film_ids: (B, N) int; films_embeddings / text_embeddings: (B, N, D)."""
    B, N = film_ids.shape
    D = films_embeddings.shape[-1]
    if batch_tile is None:
        batch_tile = _pick_batch_tile(B, N, D, films_embeddings.dtype.itemsize)
    tb = batch_tile
    assert B % tb == 0, (B, tb)

    kernel = functools.partial(_clip_loss_kernel, scale=float(np.exp(temperature)))
    # (B, 1, N): the last two block dims equal the full array dims -> always legal.
    ids3 = film_ids.astype(jnp.int32).reshape(B, 1, N)

    per_example = pl.pallas_call(
        kernel,
        out_shape=jax.ShapeDtypeStruct((B, 1, 1), jnp.float32),
        grid=(B // tb,),
        in_specs=[pl.BlockSpec((tb, 1, N), lambda b: (b, 0, 0)),
                  pl.BlockSpec((tb, N, D), lambda b: (b, 0, 0)),
                  pl.BlockSpec((tb, N, D), lambda b: (b, 0, 0))],
        out_specs=pl.BlockSpec((tb, 1, 1), lambda b: (b, 0, 0)),
        compiler_params=pltpu.CompilerParams(
            dimension_semantics=("parallel",),      # megacore split on v7x
            vmem_limit_bytes=32 << 20),             # explicit scoped limit (ok on v5e..v7x)
    )(ids3, films_embeddings, text_embeddings)

    return jnp.mean(per_example)


# ------------------------- NumPy reference (spec) ------------------------------
def _clip_loss_reference(film_ids, films_emb, text_emb, temperature=0.07):
    B = film_ids.shape[0]
    total = 0.0
    for b in range(B):
        m = film_ids[b] != 0
        f = films_emb[b][m]
        t = text_emb[b][m]
        f = f / np.maximum(np.linalg.norm(f, axis=1, keepdims=True), NORM_EPS)
        t = t / np.maximum(np.linalg.norm(t, axis=1, keepdims=True), NORM_EPS)
        sim = f @ t.T * np.exp(temperature)

        def ce(s):
            mx = s.max(axis=1, keepdims=True)
            lse = np.log(np.exp(s - mx).sum(axis=1, keepdims=True)) + mx
            return float(np.mean(lse[:, 0] - np.diag(s)))

        total += 0.5 * (ce(sim) + ce(sim.T))
    return total / B


if __name__ == "__main__":
    key = jax.random.PRNGKey(0)
    k_film, k_text = jax.random.split(key)

    B, N, D = 2, 8, 32
    # deterministic ids; 0 = padding (6 valid films in row 0, 4 in row 1)
    film_ids = jnp.array([[3, 7, 1, 4, 9, 2, 0, 0],
                          [5, 2, 8, 6, 0, 0, 0, 0]], dtype=jnp.int32)
    films_embeddings = jax.random.normal(k_film, (B, N, D), dtype=jnp.float32)
    text_embeddings = jax.random.normal(k_text, (B, N, D), dtype=jnp.float32)

    ref = _clip_loss_reference(np.asarray(film_ids),
                               np.asarray(films_embeddings),
                               np.asarray(text_embeddings),
                               temperature=0.07)

    # auto-sized batch tile (single grid step at this tiny size)
    loss = jax.block_until_ready(
        clip_loss(film_ids, films_embeddings, text_embeddings, temperature=0.07))
    # forced tile of 1 -> exercises the multi-step pipelined grid path
    loss_tiled = jax.block_until_ready(
        clip_loss(film_ids, films_embeddings, text_embeddings, temperature=0.07,
                  batch_tile=1))

    for v in (loss, loss_tiled):
        assert np.isfinite(float(v)), "non-finite loss"
        assert abs(float(v) - float(ref)) < 1e-4, (float(v), float(ref))
    print("KERNEL_OK")
</pallas_src>

<mosaic_0001>
module attributes {stable_mosaic.version = 11 : i64} {
  func.func @_clip_loss_kernel(%arg0: i32, %arg1: memref<2x1x8xi32, #tpu.memory_space<vmem>>, %arg2: memref<2x8x32xf32, #tpu.memory_space<vmem>>, %arg3: memref<2x8x32xf32, #tpu.memory_space<vmem>>, %arg4: memref<2x1x1xf32, #tpu.memory_space<vmem>>) attributes {dimension_semantics = [#tpu.dimension_semantics<parallel>], iteration_bounds = array<i64: 1>, scalar_prefetch = 0 : i64, scratch_operands = 0 : i64, tpu.core_type = #tpu.core_type<tc>, window_params = [{transform_indices = @transform_0, window_bounds = array<i64: 2, 1, 8>}, {transform_indices = @transform_1, window_bounds = array<i64: 2, 8, 32>}, {transform_indices = @transform_2, window_bounds = array<i64: 2, 8, 32>}, {transform_indices = @transform_3, window_bounds = array<i64: 2, 1, 1>}]} {
    %c0 = arith.constant 0 : index
    %c0_0 = arith.constant 0 : index
    %c0_1 = arith.constant 0 : index
    %0 = vector.load %arg1[%c0, %c0_0, %c0_1] : memref<2x1x8xi32, #tpu.memory_space<vmem>>, vector<2x1x8xi32>
    %c0_2 = arith.constant 0 : index
    %c0_3 = arith.constant 0 : index
    %c0_4 = arith.constant 0 : index
    %1 = vector.load %arg2[%c0_2, %c0_3, %c0_4] : memref<2x8x32xf32, #tpu.memory_space<vmem>>, vector<2x8x32xf32>
    %c0_5 = arith.constant 0 : index
    %c0_6 = arith.constant 0 : index
    %c0_7 = arith.constant 0 : index
    %2 = vector.load %arg3[%c0_5, %c0_6, %c0_7] : memref<2x8x32xf32, #tpu.memory_space<vmem>>, vector<2x8x32xf32>
    %3 = vector.shape_cast %0 : vector<2x1x8xi32> to vector<2x8xi32>
    %c0_i32 = arith.constant 0 : i32
    %4 = vector.broadcast %c0_i32 : i32 to vector<2x8xi32>
    %5 = arith.cmpi ne, %3, %4 : vector<2x8xi32>
    %6 = arith.extui %5 : vector<2x8xi1> to vector<2x8xi32>
    %7 = arith.sitofp %6 : vector<2x8xi32> to vector<2x8xf32>
    %8 = arith.mulf %1, %1 : vector<2x8x32xf32>
    %cst = arith.constant dense<0.000000e+00> : vector<2x8xf32>
    %9 = vector.multi_reduction <add>, %8, %cst [2] : vector<2x8x32xf32> to vector<2x8xf32>
    %10 = vector.shape_cast %9 : vector<2x8xf32> to vector<2x8x1xf32>
    %cst_8 = arith.constant 1.000000e-24 : f32
    %11 = vector.broadcast %cst_8 : f32 to vector<2x8x1xf32>
    %12 = arith.maximumf %10, %11 : vector<2x8x1xf32>
    %13 = math.rsqrt %12 : vector<2x8x1xf32>
    %cst_9 = arith.constant 1.07250822 : f32
    %14 = vector.broadcast %cst_9 : f32 to vector<2x8x1xf32>
    %15 = arith.mulf %13, %14 : vector<2x8x1xf32>
    %16 = vector.broadcast %15 : vector<2x8x1xf32> to vector<2x8x32xf32>
    %17 = arith.mulf %1, %16 : vector<2x8x32xf32>
    %18 = arith.mulf %2, %2 : vector<2x8x32xf32>
    %cst_10 = arith.constant dense<0.000000e+00> : vector<2x8xf32>
    %19 = vector.multi_reduction <add>, %18, %cst_10 [2] : vector<2x8x32xf32> to vector<2x8xf32>
    %20 = vector.shape_cast %19 : vector<2x8xf32> to vector<2x8x1xf32>
    %cst_11 = arith.constant 1.000000e-24 : f32
    %21 = vector.broadcast %cst_11 : f32 to vector<2x8x1xf32>
    %22 = arith.maximumf %20, %21 : vector<2x8x1xf32>
    %23 = math.rsqrt %22 : vector<2x8x1xf32>
    %24 = vector.broadcast %23 : vector<2x8x1xf32> to vector<2x8x32xf32>
    %25 = arith.mulf %2, %24 : vector<2x8x32xf32>
    "tpu.trace_start"() <{level = 10 : i32, message = "bnd,bmd->bnm"}> : () -> ()
    %cst_12 = arith.constant dense<0.000000e+00> : vector<2x8x8xf32>
    %26 = tpu.matmul %17, %25, %cst_12 {dimension_numbers = #tpu.dot_dimension_numbers<[2], [2], [1], [1], [0, 0, 0, 1, 1, 1], [0], [0]>} : vector<2x8x32xf32>, vector<2x8x32xf32>, vector<2x8x8xf32> -> vector<2x8x8xf32>
    "tpu.trace_stop"() : () -> ()
    %27 = arith.mulf %17, %25 : vector<2x8x32xf32>
    %cst_13 = arith.constant dense<0.000000e+00> : vector<2x8xf32>
    %28 = vector.multi_reduction <add>, %27, %cst_13 [2] : vector<2x8x32xf32> to vector<2x8xf32>
    %cst_14 = arith.constant 1.000000e+00 : f32
    %29 = vector.broadcast %cst_14 : f32 to vector<2x8xf32>
    %30 = arith.subf %29, %7 : vector<2x8xf32>
    %cst_15 = arith.constant -1.000000e+30 : f32
    %31 = vector.broadcast %cst_15 : f32 to vector<2x8xf32>
    %32 = arith.mulf %30, %31 : vector<2x8xf32>
    %cst_16 = arith.constant dense<0.000000e+00> : vector<2xf32>
    %33 = vector.multi_reduction <add>, %7, %cst_16 [1] : vector<2x8xf32> to vector<2xf32>
    %34 = vector.shape_cast %33 : vector<2xf32> to vector<2x1xf32>
    %cst_17 = arith.constant 1.000000e+00 : f32
    %35 = vector.broadcast %cst_17 : f32 to vector<2x1xf32>
    %36 = arith.maximumf %34, %35 : vector<2x1xf32>
    %37 = vector.shape_cast %32 : vector<2x8xf32> to vector<2x1x8xf32>
    %38 = vector.broadcast %37 : vector<2x1x8xf32> to vector<2x8x8xf32>
    %39 = arith.addf %26, %38 : vector<2x8x8xf32>
    %cst_18 = arith.constant dense<0xFF800000> : vector<2x8xf32>
    %40 = vector.multi_reduction <maximumf>, %39, %cst_18 [2] : vector<2x8x8xf32> to vector<2x8xf32>
    %41 = vector.shape_cast %40 : vector<2x8xf32> to vector<2x8x1xf32>
    %42 = vector.broadcast %41 : vector<2x8x1xf32> to vector<2x8x8xf32>
    %43 = arith.subf %39, %42 : vector<2x8x8xf32>
    %44 = math.exp %43 : vector<2x8x8xf32>
    %cst_19 = arith.constant dense<0.000000e+00> : vector<2x8xf32>
    %45 = vector.multi_reduction <add>, %44, %cst_19 [2] : vector<2x8x8xf32> to vector<2x8xf32>
    %46 = vector.shape_cast %45 : vector<2x8xf32> to vector<2x8x1xf32>
    %47 = math.log %46 : vector<2x8x1xf32>
    %48 = arith.addf %47, %41 : vector<2x8x1xf32>
    %49 = vector.shape_cast %48 : vector<2x8x1xf32> to vector<2x8xf32>
    %50 = vector.shape_cast %32 : vector<2x8xf32> to vector<2x8x1xf32>
    %51 = vector.broadcast %50 : vector<2x8x1xf32> to vector<2x8x8xf32>
    %52 = arith.addf %26, %51 : vector<2x8x8xf32>
    %cst_20 = arith.constant dense<0xFF800000> : vector<2x8xf32>
    %53 = vector.multi_reduction <maximumf>, %52, %cst_20 [1] : vector<2x8x8xf32> to vector<2x8xf32>
    %54 = vector.shape_cast %53 : vector<2x8xf32> to vector<2x1x8xf32>
    %55 = vector.broadcast %54 : vector<2x1x8xf32> to vector<2x8x8xf32>
    %56 = arith.subf %52, %55 : vector<2x8x8xf32>
    %57 = math.exp %56 : vector<2x8x8xf32>
    %cst_21 = arith.constant dense<0.000000e+00> : vector<2x8xf32>
    %58 = vector.multi_reduction <add>, %57, %cst_21 [1] : vector<2x8x8xf32> to vector<2x8xf32>
    %59 = vector.shape_cast %58 : vector<2x8xf32> to vector<2x1x8xf32>
    %60 = math.log %59 : vector<2x1x8xf32>
    %61 = arith.addf %60, %54 : vector<2x1x8xf32>
    %62 = vector.shape_cast %61 : vector<2x1x8xf32> to vector<2x8xf32>
    %63 = arith.addf %49, %62 : vector<2x8xf32>
    %cst_22 = arith.constant 5.000000e-01 : f32
    %64 = vector.broadcast %cst_22 : f32 to vector<2x8xf32>
    %65 = arith.mulf %64, %63 : vector<2x8xf32>
    %66 = arith.subf %65, %28 : vector<2x8xf32>
    %67 = arith.mulf %66, %7 : vector<2x8xf32>
    %cst_23 = arith.constant dense<0.000000e+00> : vector<2xf32>
    %68 = vector.multi_reduction <add>, %67, %cst_23 [1] : vector<2x8xf32> to vector<2xf32>
    %69 = vector.shape_cast %68 : vector<2xf32> to vector<2x1xf32>
    %70 = arith.divf %69, %36 : vector<2x1xf32>
    %71 = vector.shape_cast %70 : vector<2x1xf32> to vector<2x1x1xf32>
    %c0_24 = arith.constant 0 : index
    %c0_25 = arith.constant 0 : index
    %c0_26 = arith.constant 0 : index
    %72 = vector.load %arg4[%c0_24, %c0_25, %c0_26] : memref<2x1x1xf32, #tpu.memory_space<vmem>>, vector<2x1x1xf32>
    tpu.vector_store %arg4[%c0_24, %c0_25, %c0_26], %71 {strides = array<i32>} : memref<2x1x1xf32, #tpu.memory_space<vmem>>, vector<2x1x1xf32>,
    return
  }
  func.func @transform_0(%arg0: i32) -> (i32, i32, i32) {
    %c0_i32 = arith.constant 0 : i32
    %c0_i32_0 = arith.constant 0 : i32
    %c0_i32_1 = arith.constant 0 : i32
    return %arg0, %c0_i32, %c0_i32_0 : i32, i32, i32
  }
  func.func @transform_1(%arg0: i32) -> (i32, i32, i32) {
    %c0_i32 = arith.constant 0 : i32
    %c0_i32_0 = arith.constant 0 : i32
    %c0_i32_1 = arith.constant 0 : i32
    return %arg0, %c0_i32, %c0_i32_0 : i32, i32, i32
  }
  func.func @transform_2(%arg0: i32) -> (i32, i32, i32) {
    %c0_i32 = arith.constant 0 : i32
    %c0_i32_0 = arith.constant 0 : i32
    %c0_i32_1 = arith.constant 0 : i32
    return %arg0, %c0_i32, %c0_i32_0 : i32, i32, i32
  }
  func.func @transform_3(%arg0: i32) -> (i32, i32, i32) {
    %c0_i32 = arith.constant 0 : i32
    %c0_i32_0 = arith.constant 0 : i32
    %c0_i32_1 = arith.constant 0 : i32
    return %arg0, %c0_i32, %c0_i32_0 : i32, i32, i32
  }
}

</mosaic_0001>

<llo_original>
// kernel: clip_loss.1
$region0: #{clip_loss.1}
  #allocation0 [shape = 'u32[]', space=smem, size = 0x4, offset = 0x4, fixed_abs, tag = 'smem constant byte address 0x4 - core index']
  #allocation1 [shape = 'u32[144,128]{1,0:T(1,128)}', space=vmem, size = 0x12000, scoped, tag = 'internal scratch']
  %s0 = inlined_call_operand.hbm [shape: s32[2,1,8], index: 0, kind: input, shape index: {}]
  %s1 = inlined_call_operand.hbm [shape: f32[2,8,32], index: 1, kind: input, shape index: {}]
  %s2 = inlined_call_operand.hbm [shape: f32[2,8,32], index: 2, kind: input, shape index: {}]
  %s3 = inlined_call_operand.vmem [shape: f32[2,1,1], index: 3, kind: output, shape index: {}]
  %s4 = sld [smem:[#allocation0]]
  $region34: #{clip_loss.1} parent=0
    _
  %s6 = ssub.s32 1, %s4
  %s7 = scalar_select 0, %s6, %s4
  $region1: #{clip_loss.1} parent=0
    #allocation2 [shape = 'u8[1024]{0}', space=vmem, size = 0x400, scoped, tag = 'input window, operand 0, single buffered']
    #allocation3 [shape = 's32[1]{0}', space=sflag, size = 0x4, scoped, tag = 'scoped memory for clip_loss.1']
    #allocation4 [shape = 'u8[8192]{0}', space=vmem, size = 0x2000, scoped, tag = 'input window, operand 1, single buffered']
    #allocation5 [shape = 's32[1]{0}', space=sflag, size = 0x4, scoped, tag = 'scoped memory for clip_loss.1']
    #allocation6 [shape = 'u8[8192]{0}', space=vmem, size = 0x2000, scoped, tag = 'input window, operand 2, single buffered']
    %8 = vsyncpa [#allocation3], 0
    %9 = vsyncpa [#allocation5], 0
    // Predicated region
    $region2: #{clip_loss.1} parent=1 // pred_check
      _
    $region3: #{clip_loss.1} parent=1 // pred_check_branch
      %11 = sbr.rel (0) target = $region5
    $region4: #{clip_loss.1} parent=1 // pred_region
      %s13 = ssub.s32 32, 32
      %14 = vsyncadd [#allocation3], %s13
      %s15 = sshll.u32 [#allocation2], 4
      %s16 = int_to_ptr.vmem [resolvable:$true] %s15
      %21 = dma.hbm_to_vmem [thread:$0]  %s0, 32, %s16, [#allocation3], 16, 16, 1
    $region5: #{clip_loss.1} parent=1 // pred_fallthru
      _
    // Predicated region
    $region6: #{clip_loss.1} parent=1 // pred_check
      _
    $region7: #{clip_loss.1} parent=1 // pred_check_branch
      %23 = sbr.rel (0) target = $region9
    $region8: #{clip_loss.1} parent=1 // pred_region
      %s25 = ssub.s32 256, 256
      %26 = vsyncadd [#allocation5], %s25
      %s27 = sshll.u32 [#allocation4], 4
      %s28 = int_to_ptr.vmem [resolvable:$true] %s27
      %33 = dma.hbm_to_vmem [thread:$0]  %s1, 256, %s28, [#allocation5], 128, 128, 8
    $region9: #{clip_loss.1} parent=1 // pred_fallthru
      _
    // Predicated region
    $region10: #{clip_loss.1} parent=1 // pred_check
      _
    $region11: #{clip_loss.1} parent=1 // pred_check_branch
      %35 = sbr.rel (0) target = $region13
    $region12: #{clip_loss.1} parent=1 // pred_region
      %s37 = ssub.s32 256, 256
      %38 = vsyncadd [#allocation5], %s37
      %s39 = sshll.u32 [#allocation6], 4
      %s40 = int_to_ptr.vmem [resolvable:$true] %s39
      %45 = dma.hbm_to_vmem [thread:$0]  %s2, 256, %s40, [#allocation5], 128, 128, 8
    $region13: #{clip_loss.1} parent=1 // pred_fallthru
      _
    // Predicated region
    $region14: #{clip_loss.1} parent=1 // pred_check
      _
    $region15: #{clip_loss.1} parent=1 // pred_check_branch
      %47 = sbr.rel (0) target = $region17
    $region16: #{clip_loss.1} parent=1 // pred_region
      %48 = dma.done [#allocation3], 32
    $region17: #{clip_loss.1} parent=1 // pred_fallthru
      _
    // Predicated region
    $region18: #{clip_loss.1} parent=1 // pred_check
      _
    $region19: #{clip_loss.1} parent=1 // pred_check_branch
      %50 = sbr.rel (0) target = $region21
    $region20: #{clip_loss.1} parent=1 // pred_region
      %51 = dma.done [#allocation5], 256
    $region21: #{clip_loss.1} parent=1 // pred_fallthru
      _
    // Predicated region
    $region22: #{clip_loss.1} parent=1 // pred_check
      _
    $region23: #{clip_loss.1} parent=1 // pred_check_branch
      %53 = sbr.rel (0) target = $region25
    $region24: #{clip_loss.1} parent=1 // pred_region
      %54 = dma.done [#allocation5], 256
    $region25: #{clip_loss.1} parent=1 // pred_fallthru
      _
    %v55 = vld [vmem:[#allocation2] sm:$0x1]
    %v56 = vld [vmem:[#allocation2 + $0x1] sm:$0x1]
    %v57 = vld [vmem:[#allocation4] sm:$0xff]
    %v58 = vld [vmem:[#allocation4 + $0x8] sm:$0xff]
    %v59 = vld [vmem:[#allocation6] sm:$0xff]
    %v60 = vld [vmem:[#allocation6 + $0x8] sm:$0xff]
    %vm61 = vcmp.ne.s32.totalorder %v55, 0
    %vm62 = vcmp.ne.s32.totalorder %v56, 0
    %v63 = vsel %vm61, 1, 0
    %v64 = vsel %vm62, 1, 0
    %v65 = vcvt.s32.f32 %v63
    %v66 = vcvt.s32.f32 %v64
    %v67 = vmul.f32 %v57, %v57
    %v68 = vmul.f32 %v58, %v58
    %vm69 = vcmask 261120
    %v70 = vsel %vm69, %v67, 0.0
    %71 = vadd.xlane.f32.xlu0 %v70
    %v72 = vpop.xlane.xlu0 %71
    %v73 = vsel %vm69, %v68, 0.0
    %74 = vadd.xlane.f32.xlu0 %v73
    %v75 = vpop.xlane.xlu0 %74
    %v76 = vmax.f32 %v72, 1e-24
    %v77 = vmax.f32 %v75, 1e-24
    %v78 = vrsqrt.pop %v76
    %v79 = vrsqrt.pop %v77
    %v80 = vmul.f32 %v78, 1.0725082
    %v81 = vmul.f32 %v79, 1.0725082
    %v82 = vmul.f32 %v57, %v80
    %v83 = vmul.f32 %v58, %v81
    %v84 = vmul.f32 %v59, %v59
    %v85 = vmul.f32 %v60, %v60
    %v86 = vsel %vm69, %v84, 0.0
    %87 = vadd.xlane.f32.xlu0 %v86
    %v88 = vpop.xlane.xlu0 %87
    %v89 = vsel %vm69, %v85, 0.0
    %90 = vadd.xlane.f32.xlu0 %v89
    %v91 = vpop.xlane.xlu0 %90
    %v92 = vmax.f32 %v88, 1e-24
    %v93 = vmax.f32 %v91, 1e-24
    %v94 = vrsqrt.pop %v92
    %v95 = vrsqrt.pop %v93
    %v96 = vmul.f32 %v59, %v94
    %v97 = vmul.f32 %v60, %v95
    %v99 = vsel %vm69, %v82, 0
    %v102 = vsel %vm69, %v96, 0
    %104 = vmatprep.subr.mxu0 0.0
    %105 = vmatpush1.xpose.msra.mxu0 0.0
    %106 = vmatprep.subr.mxu0 0.0
    %107 = vmatpush1.xpose.msra.mxu0 0.0
    %108 = vmatprep.subr.mxu0 0.0
    %109 = vmatpush1.xpose.msra.mxu0 0.0
    %110 = vmatprep.subr.mxu0 0.0
    %111 = vmatpush1.xpose.msra.mxu0 0.0
    %112 = vmatprep.subr.mxu0 0.0
    %113 = vmatpush1.xpose.msra.mxu0 0.0
    %114 = vmatprep.subr.mxu0 0.0
    %115 = vmatpush1.xpose.msra.mxu0 0.0
    %116 = vmatprep.subr.mxu0 0.0
    %117 = vmatpush1.xpose.msra.mxu0 0.0
    %118 = vmatprep.subr.mxu0 0.0
    %119 = vmatpush1.xpose.msra.mxu0 0.0
    %120 = vmatprep.subr.mxu0 0.0
    %121 = vmatpush1.xpose.msra.mxu0 0.0
    %122 = vmatprep.subr.mxu0 0.0
    %123 = vmatpush1.xpose.msra.mxu0 0.0
    %124 = vmatprep.subr.mxu0 0.0
    %125 = vmatpush1.xpose.msra.mxu0 0.0
    %126 = vmatprep.subr.mxu0 0.0
    %127 = vmatpush1.xpose.msra.mxu0 0.0
    %128 = vmatprep.subr.mxu0 0.0
    %129 = vmatpush1.xpose.msra.mxu0 0.0
    %130 = vmatprep.subr.mxu0 0.0
    %131 = vmatpush1.xpose.msra.mxu0 0.0
    %132 = vmatprep.subr.mxu0 0.0
    %133 = vmatpush1.xpose.msra.mxu0 0.0
    %134 = vmatprep.subr.mxu0 0.0
    %135 = vmatpush1.xpose.msra.mxu0 %v102
    %136 = vmatprep.subr.mxu0 0.0
    %137 = vmatpush2.xpose.msra.mxu0 0.0
    %138 = vmatprep.subr.mxu0 0.0
    %139 = vmatpush2.xpose.msra.mxu0 0.0
    %140 = vmatprep.subr.mxu0 0.0
    %141 = vmatpush2.xpose.msra.mxu0 0.0
    %142 = vmatprep.subr.mxu0 0.0
    %143 = vmatpush2.xpose.msra.mxu0 0.0
    %144 = vmatprep.subr.mxu0 0.0
    %145 = vmatpush2.xpose.msra.mxu0 0.0
    %146 = vmatprep.subr.mxu0 0.0
    %147 = vmatpush2.xpose.msra.mxu0 0.0
    %148 = vmatprep.subr.mxu0 0.0
    %149 = vmatpush2.xpose.msra.mxu0 0.0
    %150 = vmatprep.subr.mxu0 0.0
    %151 = vmatpush2.xpose.msra.mxu0 0.0
    %152 = vmatprep.subr.mxu0 0.0
    %153 = vmatpush2.xpose.msra.mxu0 0.0
    %154 = vmatprep.subr.mxu0 0.0
    %155 = vmatpush2.xpose.msra.mxu0 0.0
    %156 = vmatprep.subr.mxu0 0.0
    %157 = vmatpush2.xpose.msra.mxu0 0.0
    %158 = vmatprep.subr.mxu0 0.0
    %159 = vmatpush2.xpose.msra.mxu0 0.0
    %160 = vmatprep.subr.mxu0 0.0
    %161 = vmatpush2.xpose.msra.mxu0 0.0
    %162 = vmatprep.subr.mxu0 0.0
    %163 = vmatpush2.xpose.msra.mxu0 0.0
    %164 = vmatprep.subr.mxu0 0.0
    %165 = vmatpush2.xpose.msra.mxu0 0.0
    %166 = vmatprep.subr.mxu0 0.0
    %167 = vmatpush2.xpose.msra.mxu0 0.0
    %168 = vmatprep.mubr.f32.mxu0 0.0
    %169 = vmatmul.mubr.f32.gmra.mxu0 %v99
    %v170 = vpop.f32.mrf.mxu0
    %v171 = vadd.f32 0.0, %v170
    %v172 = vpop.f32.mrf.mxu0
    %173 = vdwg.mxu0
    %v175 = vsel %vm69, %v83, 0
    %v178 = vsel %vm69, %v97, 0
    %180 = vmatprep.subr.mxu0 0.0
    %181 = vmatpush1.xpose.msra.mxu0 0.0
    %182 = vmatprep.subr.mxu0 0.0
    %183 = vmatpush1.xpose.msra.mxu0 0.0
    %184 = vmatprep.subr.mxu0 0.0
    %185 = vmatpush1.xpose.msra.mxu0 0.0
    %186 = vmatprep.subr.mxu0 0.0
    %187 = vmatpush1.xpose.msra.mxu0 0.0
    %188 = vmatprep.subr.mxu0 0.0
    %189 = vmatpush1.xpose.msra.mxu0 0.0
    %190 = vmatprep.subr.mxu0 0.0
    %191 = vmatpush1.xpose.msra.mxu0 0.0
    %192 = vmatprep.subr.mxu0 0.0
    %193 = vmatpush1.xpose.msra.mxu0 0.0
    %194 = vmatprep.subr.mxu0 0.0
    %195 = vmatpush1.xpose.msra.mxu0 0.0
    %196 = vmatprep.subr.mxu0 0.0
    %197 = vmatpush1.xpose.msra.mxu0 0.0
    %198 = vmatprep.subr.mxu0 0.0
    %199 = vmatpush1.xpose.msra.mxu0 0.0
    %200 = vmatprep.subr.mxu0 0.0
    %201 = vmatpush1.xpose.msra.mxu0 0.0
    %202 = vmatprep.subr.mxu0 0.0
    %203 = vmatpush1.xpose.msra.mxu0 0.0
    %204 = vmatprep.subr.mxu0 0.0
    %205 = vmatpush1.xpose.msra.mxu0 0.0
    %206 = vmatprep.subr.mxu0 0.0
    %207 = vmatpush1.xpose.msra.mxu0 0.0
    %208 = vmatprep.subr.mxu0 0.0
    %209 = vmatpush1.xpose.msra.mxu0 0.0
    %210 = vmatprep.subr.mxu0 0.0
    %211 = vmatpush1.xpose.msra.mxu0 %v178
    %212 = vmatprep.subr.mxu0 0.0
    %213 = vmatpush2.xpose.msra.mxu0 0.0
    %214 = vmatprep.subr.mxu0 0.0
    %215 = vmatpush2.xpose.msra.mxu0 0.0
    %216 = vmatprep.subr.mxu0 0.0
    %217 = vmatpush2.xpose.msra.mxu0 0.0
    %218 = vmatprep.subr.mxu0 0.0
    %219 = vmatpush2.xpose.msra.mxu0 0.0
    %220 = vmatprep.subr.mxu0 0.0
    %221 = vmatpush2.xpose.msra.mxu0 0.0
    %222 = vmatprep.subr.mxu0 0.0
    %223 = vmatpush2.xpose.msra.mxu0 0.0
    %224 = vmatprep.subr.mxu0 0.0
    %225 = vmatpush2.xpose.msra.mxu0 0.0
    %226 = vmatprep.subr.mxu0 0.0
    %227 = vmatpush2.xpose.msra.mxu0 0.0
    %228 = vmatprep.subr.mxu0 0.0
    %229 = vmatpush2.xpose.msra.mxu0 0.0
    %230 = vmatprep.subr.mxu0 0.0
    %231 = vmatpush2.xpose.msra.mxu0 0.0
    %232 = vmatprep.subr.mxu0 0.0
    %233 = vmatpush2.xpose.msra.mxu0 0.0
    %234 = vmatprep.subr.mxu0 0.0
    %235 = vmatpush2.xpose.msra.mxu0 0.0
    %236 = vmatprep.subr.mxu0 0.0
    %237 = vmatpush2.xpose.msra.mxu0 0.0
    %238 = vmatprep.subr.mxu0 0.0
    %239 = vmatpush2.xpose.msra.mxu0 0.0
    %240 = vmatprep.subr.mxu0 0.0
    %241 = vmatpush2.xpose.msra.mxu0 0.0
    %242 = vmatprep.subr.mxu0 0.0
    %243 = vmatpush2.xpose.msra.mxu0 0.0
    %244 = vmatprep.mubr.f32.mxu0 0.0
    %245 = vmatmul.mubr.f32.gmra.mxu0 %v175
    %v246 = vpop.f32.mrf.mxu0
    %v247 = vadd.f32 0.0, %v246
    %v248 = vpop.f32.mrf.mxu0
    %249 = vdwg.mxu0
    %v250 = vmul.f32 %v82, %v96
    %v251 = vmul.f32 %v83, %v97
    %v252 = vsel %vm69, %v250, 0.0
    %253 = vadd.xlane.f32.xlu0 %v252
    %v254 = vpop.xlane.xlu0 %253
    %v255 = vsel %vm69, %v251, 0.0
    %256 = vadd.xlane.f32.xlu0 %v255
    %v257 = vpop.xlane.xlu0 %256
    %v258 = vsub.f32 1.0, %v65
    %v259 = vsub.f32 1.0, %v66
    %v260 = vmul.f32 %v258, -1e+30
    %v261 = vmul.f32 %v259, -1e+30
    %v264 = vcombine.low %v65, %v66
    %v266 = vunpack.c.l.s4 1966171168
    %v267 = vunpack.c.0.s8 %v266
    %v268 = vlaneseq
    %v269 = vshrl.u32 %v268, 7
    %v270 = vsub.s32 %v267, %v269
    %v271 = vrot.slane %v264, %v270
    %v273 = vunpack.c.l.s4 1966171168
    %v274 = vunpack.c.0.s8 %v273
    %v275 = vlaneseq
    %v276 = vshrl.u32 %v275, 7
    %v277 = vsub.s32 %v274, %v276
    %v278 = vrot.slane %v271, %v277
    %vm280 = vcmask 58368
    %v281 = vsel %vm280, %v278, 0.0
    %282 = vadd.xlane.f32.xlu0 %v281
    %v283 = vpop.xlane.xlu0 %282
    %v284 = vmax.f32 %v283, 1.0
    %v287 = vlaneseq
    %v288 = vshrl.u32 %v287, 7
    %v289 = vsub.s32 0, %v288
    %v290 = vrot.slane %v260, %v289
    %v291 = vlaneseq
    %v292 = vshrl.u32 %v291, 7
    %v293 = vsub.s32 0, %v292
    %v294 = vrot.slane %v261, %v293
    %v297 = vadd.f32 %v171, %v290
    %v298 = vadd.f32 %v247, %v294
    %vm299 = vcmask 64512
    %v300 = vsel %vm299, %v297, -inf
    %301 = vmax.xlane.f32.xlu0 %v300
    %v302 = vpop.xlane.xlu0 %301
    %v303 = vsel %vm299, %v298, -inf
    %304 = vmax.xlane.f32.xlu0 %v303
    %v305 = vpop.xlane.xlu0 %304
    %v306 = vsub.f32 %v297, %v302
    %v307 = vsub.f32 %v298, %v305
    %v308 = vmul.f32 %v306, 1.442695
    %v309 = vpow.pop %v308
    %v310 = vmul.f32 %v307, 1.442695
    %v311 = vpow.pop %v310
    %v312 = vsel %vm299, %v309, 0.0
    %313 = vadd.xlane.f32.xlu0 %v312
    %v314 = vpop.xlane.xlu0 %313
    %v315 = vsel %vm299, %v311, 0.0
    %316 = vadd.xlane.f32.xlu0 %v315
    %v317 = vpop.xlane.xlu0 %316
    %v318 = vlog2.pop %v314
    %v319 = vmul.f32 %v318, 0.6931472
    %v320 = vlog2.pop %v317
    %v321 = vmul.f32 %v320, 0.6931472
    %v322 = vadd.f32 %v319, %v302
    %v323 = vadd.f32 %v321, %v305
    %v324 = vlaneseq
    %v325 = vshrl.u32 %v324, 7
    %v326 = vsub.s32 0, %v325
    %v327 = vrot.slane %v260, %v326
    %329 = vbcast.lane.b32.xlu0 %v327, 256
    %v330 = vpop.permute.xlu0 %329
    %v331 = vlaneseq
    %v332 = vshrl.u32 %v331, 7
    %v333 = vsub.s32 0, %v332
    %v334 = vrot.slane %v261, %v333
    %336 = vbcast.lane.b32.xlu0 %v334, 256
    %v337 = vpop.permute.xlu0 %336
    %v338 = vadd.f32 %v171, %v330
    %v339 = vadd.f32 %v247, %v337
    %v340 = vsel %vm299, %v338, -inf
    %v341 = vrot.slane %v340, 4
    %v342 = vmax.f32 %v340, %v341
    %v343 = vrot.slane %v342, 2
    %v344 = vmax.f32 %v342, %v343
    %v345 = vrot.slane %v344, 1
    %v346 = vmax.f32 %v344, %v345
    %v347 = vsel %vm299, %v339, -inf
    %v348 = vrot.slane %v347, 4
    %v349 = vmax.f32 %v347, %v348
    %v350 = vrot.slane %v349, 2
    %v351 = vmax.f32 %v349, %v350
    %v352 = vrot.slane %v351, 1
    %v353 = vmax.f32 %v351, %v352
    %v354 = vsub.f32 %v338, %v346
    %v355 = vsub.f32 %v339, %v353
    %v356 = vmul.f32 %v354, 1.442695
    %v357 = vpow.pop %v356
    %v358 = vmul.f32 %v355, 1.442695
    %v359 = vpow.pop %v358
    %v360 = vsel %vm299, %v357, 0.0
    %v361 = vrot.slane %v360, 4
    %v362 = vadd.f32 %v360, %v361
    %v363 = vrot.slane %v362, 2
    %v364 = vadd.f32 %v362, %v363
    %v365 = vrot.slane %v364, 1
    %v366 = vadd.f32 %v364, %v365
    %v367 = vsel %vm299, %v359, 0.0
    %v368 = vrot.slane %v367, 4
    %v369 = vadd.f32 %v367, %v368
    %v370 = vrot.slane %v369, 2
    %v371 = vadd.f32 %v369, %v370
    %v372 = vrot.slane %v371, 1
    %v373 = vadd.f32 %v371, %v372
    %v374 = vlog2.pop %v366
    %v375 = vmul.f32 %v374, 0.6931472
    %v376 = vlog2.pop %v373
    %v377 = vmul.f32 %v376, 0.6931472
    %v378 = vadd.f32 %v375, %v346
    %v379 = vadd.f32 %v377, %v353
    %383 = vbcast.lane.b32.xlu0 %v378, 256
    %v384 = vpop.permute.xlu0 %383
    %386 = vbcast.lane.b32.xlu0 %v379, 256
    %v387 = vpop.permute.xlu0 %386
    %v390 = vadd.f32 %v322, %v384
    %v391 = vadd.f32 %v323, %v387
    %v392 = vmul.f32 %v390, 0.5
    %v393 = vmul.f32 %v391, 0.5
    %v394 = vsub.f32 %v392, %v254
    %v395 = vsub.f32 %v393, %v257
    %v396 = vlaneseq
    %v397 = vshrl.u32 %v396, 7
    %v398 = vsub.s32 0, %v397
    %v399 = vrot.slane %v65, %v398
    %v400 = vlaneseq
    %v401 = vshrl.u32 %v400, 7
    %v402 = vsub.s32 0, %v401
    %v403 = vrot.slane %v66, %v402
    %405 = vbcast.lane.b32.xlu0 %v399, 256
    %v406 = vpop.permute.xlu0 %405
    %408 = vbcast.lane.b32.xlu0 %v403, 256
    %v409 = vpop.permute.xlu0 %408
    %v412 = vmul.f32 %v394, %v406
    %v413 = vmul.f32 %v395, %v409
    %416 = vset.pattern.permute.xlu0 0
    %417 = vperm.xlu0 %416, %v412
    %v418 = vpop.permute.xlu0 %417
    %419 = vset.pattern.permute.xlu0 0
    %420 = vperm.xlu0 %419, %v413
    %v421 = vpop.permute.xlu0 %420
    %v422 = vlaneseq
    %v423 = vand.u32 %v422, 127
    %v424 = vlaneseq
    %v425 = vshrl.u32 %v424, 7
    %v426 = vsub.s32 %v423, %v425
    %v427 = vrot.slane %v418, %v426
    %v428 = vlaneseq
    %v429 = vshrl.u32 %v428, 7
    %v430 = vsub.s32 %v423, %v429
    %v431 = vrot.slane %v421, %v430
    %vm432 = vcmask 1041409
    %v433 = vsel %vm432, %v431, %v427
    %v435 = vsel %vm280, %v433, 0.0
    %436 = vadd.xlane.f32.xlu0 %v435
    %v437 = vpop.xlane.xlu0 %436
    %v438 = vrcp.pop %v284
    %v439 = vmul.f32 %v437, %v438
    %v441 = vlaneseq
    %v442 = vshrl.u32 %v441, 7
    %v443 = vsub.s32 0, %v442
    %v444 = vrot.slane %v439, %v443
    %v445 = vlaneseq
    %v446 = vshrl.u32 %v445, 7
    %v447 = vsub.s32 1, %v446
    %v448 = vrot.slane %v439, %v447
    %vm451 = vcmask 0
    %452 = vst.msk [vmem:[%s3] sm:$0x1] %vm451, %v444
    %453 = vst.msk [vmem:[%s3 + $0x1] sm:$0x1] %vm451, %v448
    // Predicated region
    $region26: #{clip_loss.1} parent=1 // pred_check
      _
    $region27: #{clip_loss.1} parent=1 // pred_check_branch
      %455 = sbr.rel (0) target = $region29
    $region28: #{clip_loss.1} parent=1 // pred_region
      _
    $region29: #{clip_loss.1} parent=1 // pred_fallthru
      _
    // Predicated region
    $region30: #{clip_loss.1} parent=1 // pred_check
      _
    $region31: #{clip_loss.1} parent=1 // pred_check_branch
      %457 = sbr.rel (0) target = $region33
    $region32: #{clip_loss.1} parent=1 // pred_region
      _
    $region33: #{clip_loss.1} parent=1 // pred_fallthru
      _
    %458 = vsyncpa [#allocation3], 1
    %459 = vsyncpa [#allocation5], 1

</llo_original>
